<compile_context>
chip_gen: v6e
topology: v6e:2x2x1
jax: 0.10.0
libtpu: 0.0.40
codegen_flags: <defaults>
</compile_context>

<pallas_src>
import functools

import jax
import jax.numpy as jnp
from jax.experimental import pallas as pl
from jax.experimental.pallas import tpu as pltpu

_LANE = 128


def _round_up(x, m):
    return ((x + m - 1) // m) * m


def _cdiv(a, b):
    return -(-a // b)


# ----------------------------------------------------------------------------
# Pallas kernel: fused softmax + one-hot + dice statistics reduction
# ----------------------------------------------------------------------------

def _dice_stats_kernel(x_ref, t_ref, o_ref, inter_acc, p_acc, t_acc, *,
                       n_classes, logit, needs_mask, hw):
    """Accumulate per-(batch, class) [sum(p*t), sum(p), sum(t)] over pixel tiles.

    x_ref:  (1, K, TR, 128) logits / probabilities block (native dtype)
    t_ref:  (1, TR, 128)    integer labels block
    o_ref:  (1, 1, K, 3)    final statistics (written on the last pixel tile only)
    *_acc:  (K, 128) f32    lane-dense running partials (VMEM scratch)
    """
    s = pl.program_id(1)          # split index (parallel)
    r = pl.program_id(2)          # pixel-tile index within the split (reduction)
    n_s = pl.num_programs(1)
    n_r = pl.num_programs(2)

    @pl.when(r == 0)
    def _init():
        inter_acc[...] = jnp.zeros_like(inter_acc)
        p_acc[...] = jnp.zeros_like(p_acc)
        t_acc[...] = jnp.zeros_like(t_acc)

    labels = t_ref[0]                                        # (TR, 128) int

    def accumulate(valid):
        vf = None if valid is None else valid.astype(jnp.float32)
        planes = [x_ref[0, c].astype(jnp.float32) for c in range(n_classes)]
        if valid is not None:
            # select (not multiply): out-of-bounds tile contents may be garbage / NaN
            planes = [jnp.where(valid, pc, 0.0) for pc in planes]

        if logit:                                            # softmax over classes
            m = planes[0]
            for c in range(1, n_classes):
                m = jnp.maximum(m, planes[c])
            exps = [jnp.exp(pc - m) for pc in planes]        # EUP
            denom = exps[0]
            for c in range(1, n_classes):
                denom = denom + exps[c]
            inv = pl.reciprocal(denom, approx=True)          # EUP, not a VALU chain
            probs = [e * inv for e in exps]
            if vf is not None:
                probs = [p * vf for p in probs]              # drop padded pixels
        else:
            probs = planes                                   # already masked by where()

        for c in range(n_classes):                           # K is tiny: static unroll
            oh = (labels == c).astype(jnp.float32)           # one-hot plane
            if vf is not None:
                oh = oh * vf
            p_c = probs[c]
            # sublane-only reductions; cross-lane reduce is deferred to the last tile
            inter_acc[c:c + 1, :] += jnp.sum(p_c * oh, axis=0, keepdims=True)
            p_acc[c:c + 1, :] += jnp.sum(p_c, axis=0, keepdims=True)
            t_acc[c:c + 1, :] += jnp.sum(oh, axis=0, keepdims=True)

    if needs_mask:
        # only the globally-last pixel tile can contain out-of-range pixels
        last = jnp.logical_and(s == n_s - 1, r == n_r - 1)

        @pl.when(jnp.logical_not(last))
        def _fast():
            accumulate(None)

        @pl.when(last)
        def _ragged():
            tr = x_ref.shape[2]
            base = (s * n_r + r) * (tr * _LANE)              # global pixel offset
            row = jax.lax.broadcasted_iota(jnp.int32, (tr, _LANE), 0)
            lane = jax.lax.broadcasted_iota(jnp.int32, (tr, _LANE), 1)
            accumulate(base + row * _LANE + lane < hw)
    else:
        accumulate(None)

    @pl.when(r == n_r - 1)
    def _finalize():
        o_ref[0, 0] = jnp.concatenate(
            [jnp.sum(inter_acc[...], axis=1, keepdims=True),
             jnp.sum(p_acc[...], axis=1, keepdims=True),
             jnp.sum(t_acc[...], axis=1, keepdims=True)], axis=1)   # (K, 3)


# ----------------------------------------------------------------------------
# Wrapper (SoftDiceLoss.forward)
# ----------------------------------------------------------------------------

def soft_dice_loss(logits, target, *, n_classes=2, alpha=0.5, logit=False,
                   tile_rows=2048):
    """SoftDiceLoss(n_classes, logit, a=alpha).forward(logits, target).

    logits: (B, n_classes, ...) float; target: (B, ...) integer class labels.
    """
    smooth = 0.01
    bs = logits.shape[0]
    x = logits.reshape(bs, n_classes, -1)          # keep native dtype (no f32 upcast)
    t = target.reshape(bs, -1)
    if not jnp.issubdtype(t.dtype, jnp.integer):
        t = t.astype(jnp.int32)
    hw = x.shape[-1]

    rows = _cdiv(hw, _LANE)
    pad = rows * _LANE - hw
    if pad:
        # TODO(synk): a one-off pad copy is unavoidable when hw % 128 != 0 (the
        # (rows, 128) view needs lane alignment); lane-aligned inputs skip this.
        x = jnp.pad(x, ((0, 0), (0, 0), (0, pad)))
        t = jnp.pad(t, ((0, 0), (0, pad)))
    x4 = x.reshape(bs, n_classes, rows, _LANE)
    t3 = t.reshape(bs, rows, _LANE)

    # Row tile: multiple of 8 (or == rows), capped so double-buffered inputs stay
    # well inside scoped VMEM even for large n_classes.
    bytes_per_row = (n_classes * x4.dtype.itemsize + t3.dtype.itemsize) * _LANE
    budget = 24 * 1024 * 1024
    max_tr = max(8, (budget // (2 * bytes_per_row)) // 8 * 8)
    desired = min(_round_up(max(tile_rows, 8), 8), max_tr)
    tr = rows if rows <= desired else desired
    num_tiles = _cdiv(rows, tr)

    # Use both TensorCores (v7x / megacore) for single-image calls by splitting the
    # pixel tiles across a second parallel grid axis.
    n_splits = 2 if (bs == 1 and num_tiles >= 2 and num_tiles % 2 == 0) else 1
    tps = num_tiles // n_splits
    needs_mask = (num_tiles * tr * _LANE) != hw

    kernel = functools.partial(_dice_stats_kernel, n_classes=n_classes, logit=logit,
                               needs_mask=needs_mask, hw=hw)

    stats = pl.pallas_call(
        kernel,
        out_shape=jax.ShapeDtypeStruct((bs, n_splits, n_classes, 3), jnp.float32),
        grid=(bs, n_splits, tps),
        in_specs=[
            pl.BlockSpec((1, n_classes, tr, _LANE),
                         lambda b, s, r: (b, 0, s * tps + r, 0)),
            pl.BlockSpec((1, tr, _LANE),
                         lambda b, s, r: (b, s * tps + r, 0)),
        ],
        out_specs=pl.BlockSpec((1, 1, n_classes, 3), lambda b, s, r: (b, s, 0, 0)),
        scratch_shapes=[pltpu.VMEM((n_classes, _LANE), jnp.float32)] * 3,
        compiler_params=pltpu.CompilerParams(
            dimension_semantics=("parallel", "parallel", "arbitrary"),
            vmem_limit_bytes=32 * 1024 * 1024),
    )(x4, t3)

    stats = jnp.sum(stats, axis=1)                 # combine split partials -> (B, K, 3)
    inter = stats[..., 0]
    sum_p = stats[..., 1]
    sum_t = stats[..., 2]

    # Reference hard-codes a length-2 weight [1-a, a] applied to the intersection only
    # (its broadcasting, like the PyTorch original, requires n_classes == 2).
    w = jnp.array([1.0 - alpha, alpha], jnp.float32)[None, :]
    inter_w = w * inter + smooth
    union = sum_p + sum_t + smooth
    scores = 2.0 * inter_w / union
    return 1.0 - jnp.sum(scores) / float(bs)


# ----------------------------------------------------------------------------
# Pure-JAX reference (mirrors the PyTorch code) for verification
# ----------------------------------------------------------------------------

def soft_dice_loss_ref(logits, target, n_classes=2, alpha=0.5, logit=False):
    smooth = 0.01
    bs = logits.shape[0]
    x = logits.astype(jnp.float32)
    if logit:
        x = jax.nn.softmax(x, axis=1)
    x = x.reshape(bs, n_classes, -1)
    t = jax.nn.one_hot(target.reshape(bs, -1).astype(jnp.int32), n_classes,
                       dtype=jnp.float32).transpose(0, 2, 1)
    w = jnp.array([1.0 - alpha, alpha], jnp.float32)[None, :]
    inter = w * jnp.sum(x * t, axis=2) + smooth
    union = jnp.sum(x, axis=2) + jnp.sum(t, axis=2) + smooth
    scores = 2.0 * inter / union
    return 1.0 - jnp.sum(scores) / float(bs)


# ----------------------------------------------------------------------------
# Main
# ----------------------------------------------------------------------------

if __name__ == "__main__":
    key = jax.random.PRNGKey(0)
    k1, k2, k3, k4, k5, k6 = jax.random.split(key, 6)
    K = 2

    # Case 1: f32 logits (softmax in kernel), lane-aligned pixel count, batch=2.
    B, H, W = 2, 32, 32
    logits = jax.random.normal(k1, (B, K, H, W), jnp.float32)
    labels = jax.random.randint(k2, (B, H, W), 0, K, jnp.int32)
    loss_fn = jax.jit(functools.partial(soft_dice_loss, n_classes=K, alpha=0.5,
                                        logit=True))
    loss = loss_fn(logits, labels)
    jax.block_until_ready(loss)
    ref = soft_dice_loss_ref(logits, labels, n_classes=K, alpha=0.5, logit=True)
    assert bool(jnp.isfinite(loss))
    assert abs(float(loss) - float(ref)) < 5e-3, (float(loss), float(ref))

    # Case 2: probabilities (no softmax), ragged pixel count (50x37) exercising the
    #         iota mask, multiple pixel tiles, asymmetric class weight.
    B2, H2, W2 = 3, 50, 37
    probs = jax.nn.softmax(jax.random.normal(k3, (B2, K, H2, W2), jnp.float32), axis=1)
    labels2 = jax.random.randint(k4, (B2, H2, W2), 0, K, jnp.int32)
    loss_fn2 = jax.jit(functools.partial(soft_dice_loss, n_classes=K, alpha=0.3,
                                         logit=False, tile_rows=8))
    loss2 = loss_fn2(probs, labels2)
    jax.block_until_ready(loss2)
    ref2 = soft_dice_loss_ref(probs, labels2, n_classes=K, alpha=0.3, logit=False)
    assert abs(float(loss2) - float(ref2)) < 1e-4, (float(loss2), float(ref2))

    # Case 3: bf16 logits streamed natively, batch=1 (pixel tiles split across the two
    #         parallel cores), ragged pixel count (63x65) through the masked softmax.
    B3, H3, W3 = 1, 63, 65
    logits3 = jax.random.normal(k5, (B3, K, H3, W3), jnp.float32).astype(jnp.bfloat16)
    labels3 = jax.random.randint(k6, (B3, H3, W3), 0, K, jnp.int32)
    loss_fn3 = jax.jit(functools.partial(soft_dice_loss, n_classes=K, alpha=0.5,
                                         logit=True, tile_rows=8))
    loss3 = loss_fn3(logits3, labels3)
    jax.block_until_ready(loss3)
    ref3 = soft_dice_loss_ref(logits3, labels3, n_classes=K, alpha=0.5, logit=True)
    assert abs(float(loss3) - float(ref3)) < 5e-3, (float(loss3), float(ref3))

    print("KERNEL_OK")
</pallas_src>

<mosaic_0001>
module attributes {stable_mosaic.version = 11 : i64} {
  func.func @_dice_stats_kernel(%arg0: i32, %arg1: i32, %arg2: i32, %arg3: memref<1x2x8x128xf32, #tpu.memory_space<vmem>>, %arg4: memref<1x8x128xi32, #tpu.memory_space<vmem>>, %arg5: memref<1x1x2x3xf32, #tpu.memory_space<vmem>>, %arg6: memref<2x128xf32, #tpu.memory_space<vmem>>, %arg7: memref<2x128xf32, #tpu.memory_space<vmem>>, %arg8: memref<2x128xf32, #tpu.memory_space<vmem>>) attributes {dimension_semantics = [#tpu.dimension_semantics<parallel>, #tpu.dimension_semantics<parallel>, #tpu.dimension_semantics<arbitrary>], iteration_bounds = array<i64: 2, 1, 1>, scalar_prefetch = 0 : i64, scratch_operands = 3 : i64, tpu.core_type = #tpu.core_type<tc>, window_params = [{transform_indices = @transform_0, window_bounds = array<i64: 1, 2, 8, 128>}, {transform_indices = @transform_1, window_bounds = array<i64: 1, 8, 128>}, {transform_indices = @transform_2, window_bounds = array<i64: 1, 1, 2, 3>}]} {
    %c0_i32 = arith.constant 0 : i32
    %0 = arith.cmpi eq, %arg2, %c0_i32 : i32
    %1 = arith.extui %0 : i1 to i32
    %c0_i32_0 = arith.constant 0 : i32
    %2 = arith.cmpi ne, %1, %c0_i32_0 : i32
    scf.if %2 {
      %cst_42 = arith.constant 0.000000e+00 : f32
      %61 = vector.broadcast %cst_42 : f32 to vector<2x128xf32>
      %c0_43 = arith.constant 0 : index
      %c0_44 = arith.constant 0 : index
      %62 = vector.load %arg6[%c0_43, %c0_44] : memref<2x128xf32, #tpu.memory_space<vmem>>, vector<2x128xf32>
      tpu.vector_store %arg6[%c0_43, %c0_44], %61 {strides = array<i32>} : memref<2x128xf32, #tpu.memory_space<vmem>>, vector<2x128xf32>,
      %cst_45 = arith.constant 0.000000e+00 : f32
      %63 = vector.broadcast %cst_45 : f32 to vector<2x128xf32>
      %c0_46 = arith.constant 0 : index
      %c0_47 = arith.constant 0 : index
      %64 = vector.load %arg7[%c0_46, %c0_47] : memref<2x128xf32, #tpu.memory_space<vmem>>, vector<2x128xf32>
      tpu.vector_store %arg7[%c0_46, %c0_47], %63 {strides = array<i32>} : memref<2x128xf32, #tpu.memory_space<vmem>>, vector<2x128xf32>,
      %cst_48 = arith.constant 0.000000e+00 : f32
      %65 = vector.broadcast %cst_48 : f32 to vector<2x128xf32>
      %c0_49 = arith.constant 0 : index
      %c0_50 = arith.constant 0 : index
      %66 = vector.load %arg8[%c0_49, %c0_50] : memref<2x128xf32, #tpu.memory_space<vmem>>, vector<2x128xf32>
      tpu.vector_store %arg8[%c0_49, %c0_50], %65 {strides = array<i32>} : memref<2x128xf32, #tpu.memory_space<vmem>>, vector<2x128xf32>,
    } else {
    }
    %c0 = arith.constant 0 : index
    %c0_1 = arith.constant 0 : index
    %c0_2 = arith.constant 0 : index
    %3 = vector.load %arg4[%c0, %c0_1, %c0_2] : memref<1x8x128xi32, #tpu.memory_space<vmem>>, vector<1x8x128xi32>
    %4 = vector.shape_cast %3 : vector<1x8x128xi32> to vector<8x128xi32>
    %c0_3 = arith.constant 0 : index
    %c0_4 = arith.constant 0 : index
    %c0_5 = arith.constant 0 : index
    %c0_6 = arith.constant 0 : index
    %5 = vector.load %arg3[%c0_3, %c0_4, %c0_5, %c0_6] : memref<1x2x8x128xf32, #tpu.memory_space<vmem>>, vector<1x1x8x128xf32>
    %6 = vector.shape_cast %5 : vector<1x1x8x128xf32> to vector<8x128xf32>
    %c0_7 = arith.constant 0 : index
    %c1 = arith.constant 1 : index
    %c0_8 = arith.constant 0 : index
    %c0_9 = arith.constant 0 : index
    %7 = vector.load %arg3[%c0_7, %c1, %c0_8, %c0_9] : memref<1x2x8x128xf32, #tpu.memory_space<vmem>>, vector<1x1x8x128xf32>
    %8 = vector.shape_cast %7 : vector<1x1x8x128xf32> to vector<8x128xf32>
    %9 = arith.maximumf %6, %8 : vector<8x128xf32>
    %10 = arith.subf %6, %9 : vector<8x128xf32>
    %11 = math.exp %10 : vector<8x128xf32>
    %12 = arith.subf %8, %9 : vector<8x128xf32>
    %13 = math.exp %12 : vector<8x128xf32>
    %14 = arith.addf %11, %13 : vector<8x128xf32>
    %15 = tpu.reciprocal %14 {approx = true} : vector<8x128xf32> -> vector<8x128xf32>
    %16 = arith.mulf %11, %15 : vector<8x128xf32>
    %17 = arith.mulf %13, %15 : vector<8x128xf32>
    %c0_i32_10 = arith.constant 0 : i32
    %18 = vector.broadcast %c0_i32_10 : i32 to vector<8x128xi32>
    %19 = arith.cmpi eq, %4, %18 : vector<8x128xi32>
    %20 = arith.extui %19 : vector<8x128xi1> to vector<8x128xi32>
    %21 = arith.sitofp %20 : vector<8x128xi32> to vector<8x128xf32>
    %c0_11 = arith.constant 0 : index
    %c0_12 = arith.constant 0 : index
    %22 = vector.load %arg6[%c0_11, %c0_12] : memref<2x128xf32, #tpu.memory_space<vmem>>, vector<1x128xf32>
    %23 = arith.mulf %16, %21 : vector<8x128xf32>
    %cst = arith.constant dense<0.000000e+00> : vector<128xf32>
    %24 = vector.multi_reduction <add>, %23, %cst [0] : vector<8x128xf32> to vector<128xf32>
    %25 = vector.shape_cast %24 : vector<128xf32> to vector<1x128xf32>
    %26 = arith.addf %22, %25 : vector<1x128xf32>
    %c0_13 = arith.constant 0 : index
    %c0_14 = arith.constant 0 : index
    %27 = vector.load %arg6[%c0_13, %c0_14] : memref<2x128xf32, #tpu.memory_space<vmem>>, vector<1x128xf32>
    tpu.vector_store %arg6[%c0_13, %c0_14], %26 {strides = array<i32>} : memref<2x128xf32, #tpu.memory_space<vmem>>, vector<1x128xf32>,
    %c0_15 = arith.constant 0 : index
    %c0_16 = arith.constant 0 : index
    %28 = vector.load %arg7[%c0_15, %c0_16] : memref<2x128xf32, #tpu.memory_space<vmem>>, vector<1x128xf32>
    %cst_17 = arith.constant dense<0.000000e+00> : vector<128xf32>
    %29 = vector.multi_reduction <add>, %16, %cst_17 [0] : vector<8x128xf32> to vector<128xf32>
    %30 = vector.shape_cast %29 : vector<128xf32> to vector<1x128xf32>
    %31 = arith.addf %28, %30 : vector<1x128xf32>
    %c0_18 = arith.constant 0 : index
    %c0_19 = arith.constant 0 : index
    %32 = vector.load %arg7[%c0_18, %c0_19] : memref<2x128xf32, #tpu.memory_space<vmem>>, vector<1x128xf32>
    tpu.vector_store %arg7[%c0_18, %c0_19], %31 {strides = array<i32>} : memref<2x128xf32, #tpu.memory_space<vmem>>, vector<1x128xf32>,
    %c0_20 = arith.constant 0 : index
    %c0_21 = arith.constant 0 : index
    %33 = vector.load %arg8[%c0_20, %c0_21] : memref<2x128xf32, #tpu.memory_space<vmem>>, vector<1x128xf32>
    %cst_22 = arith.constant dense<0.000000e+00> : vector<128xf32>
    %34 = vector.multi_reduction <add>, %21, %cst_22 [0] : vector<8x128xf32> to vector<128xf32>
    %35 = vector.shape_cast %34 : vector<128xf32> to vector<1x128xf32>
    %36 = arith.addf %33, %35 : vector<1x128xf32>
    %c0_23 = arith.constant 0 : index
    %c0_24 = arith.constant 0 : index
    %37 = vector.load %arg8[%c0_23, %c0_24] : memref<2x128xf32, #tpu.memory_space<vmem>>, vector<1x128xf32>
    tpu.vector_store %arg8[%c0_23, %c0_24], %36 {strides = array<i32>} : memref<2x128xf32, #tpu.memory_space<vmem>>, vector<1x128xf32>,
    %c1_i32 = arith.constant 1 : i32
    %38 = vector.broadcast %c1_i32 : i32 to vector<8x128xi32>
    %39 = arith.cmpi eq, %4, %38 : vector<8x128xi32>
    %40 = arith.extui %39 : vector<8x128xi1> to vector<8x128xi32>
    %41 = arith.sitofp %40 : vector<8x128xi32> to vector<8x128xf32>
    %c1_25 = arith.constant 1 : index
    %c0_26 = arith.constant 0 : index
    %42 = vector.load %arg6[%c1_25, %c0_26] : memref<2x128xf32, #tpu.memory_space<vmem>>, vector<1x128xf32>
    %43 = arith.mulf %17, %41 : vector<8x128xf32>
    %cst_27 = arith.constant dense<0.000000e+00> : vector<128xf32>
    %44 = vector.multi_reduction <add>, %43, %cst_27 [0] : vector<8x128xf32> to vector<128xf32>
    %45 = vector.shape_cast %44 : vector<128xf32> to vector<1x128xf32>
    %46 = arith.addf %42, %45 : vector<1x128xf32>
    %c1_28 = arith.constant 1 : index
    %c0_29 = arith.constant 0 : index
    %47 = vector.load %arg6[%c1_28, %c0_29] : memref<2x128xf32, #tpu.memory_space<vmem>>, vector<1x128xf32>
    tpu.vector_store %arg6[%c1_28, %c0_29], %46 {strides = array<i32>} : memref<2x128xf32, #tpu.memory_space<vmem>>, vector<1x128xf32>,
    %c1_30 = arith.constant 1 : index
    %c0_31 = arith.constant 0 : index
    %48 = vector.load %arg7[%c1_30, %c0_31] : memref<2x128xf32, #tpu.memory_space<vmem>>, vector<1x128xf32>
    %cst_32 = arith.constant dense<0.000000e+00> : vector<128xf32>
    %49 = vector.multi_reduction <add>, %17, %cst_32 [0] : vector<8x128xf32> to vector<128xf32>
    %50 = vector.shape_cast %49 : vector<128xf32> to vector<1x128xf32>
    %51 = arith.addf %48, %50 : vector<1x128xf32>
    %c1_33 = arith.constant 1 : index
    %c0_34 = arith.constant 0 : index
    %52 = vector.load %arg7[%c1_33, %c0_34] : memref<2x128xf32, #tpu.memory_space<vmem>>, vector<1x128xf32>
    tpu.vector_store %arg7[%c1_33, %c0_34], %51 {strides = array<i32>} : memref<2x128xf32, #tpu.memory_space<vmem>>, vector<1x128xf32>,
    %c1_35 = arith.constant 1 : index
    %c0_36 = arith.constant 0 : index
    %53 = vector.load %arg8[%c1_35, %c0_36] : memref<2x128xf32, #tpu.memory_space<vmem>>, vector<1x128xf32>
    %cst_37 = arith.constant dense<0.000000e+00> : vector<128xf32>
    %54 = vector.multi_reduction <add>, %41, %cst_37 [0] : vector<8x128xf32> to vector<128xf32>
    %55 = vector.shape_cast %54 : vector<128xf32> to vector<1x128xf32>
    %56 = arith.addf %53, %55 : vector<1x128xf32>
    %c1_38 = arith.constant 1 : index
    %c0_39 = arith.constant 0 : index
    %57 = vector.load %arg8[%c1_38, %c0_39] : memref<2x128xf32, #tpu.memory_space<vmem>>, vector<1x128xf32>
    tpu.vector_store %arg8[%c1_38, %c0_39], %56 {strides = array<i32>} : memref<2x128xf32, #tpu.memory_space<vmem>>, vector<1x128xf32>,
    %c0_i32_40 = arith.constant 0 : i32
    %58 = arith.cmpi eq, %arg2, %c0_i32_40 : i32
    %59 = arith.extui %58 : i1 to i32
    %c0_i32_41 = arith.constant 0 : i32
    %60 = arith.cmpi ne, %59, %c0_i32_41 : i32
    scf.if %60 {
      %c0_42 = arith.constant 0 : index
      %c0_43 = arith.constant 0 : index
      %61 = vector.load %arg6[%c0_42, %c0_43] : memref<2x128xf32, #tpu.memory_space<vmem>>, vector<2x128xf32>
      %cst_44 = arith.constant dense<0.000000e+00> : vector<2xf32>
      %62 = vector.multi_reduction <add>, %61, %cst_44 [1] : vector<2x128xf32> to vector<2xf32>
      %63 = vector.shape_cast %62 : vector<2xf32> to vector<2x1xf32>
      %c0_45 = arith.constant 0 : index
      %c0_46 = arith.constant 0 : index
      %64 = vector.load %arg7[%c0_45, %c0_46] : memref<2x128xf32, #tpu.memory_space<vmem>>, vector<2x128xf32>
      %cst_47 = arith.constant dense<0.000000e+00> : vector<2xf32>
      %65 = vector.multi_reduction <add>, %64, %cst_47 [1] : vector<2x128xf32> to vector<2xf32>
      %66 = vector.shape_cast %65 : vector<2xf32> to vector<2x1xf32>
      %c0_48 = arith.constant 0 : index
      %c0_49 = arith.constant 0 : index
      %67 = vector.load %arg8[%c0_48, %c0_49] : memref<2x128xf32, #tpu.memory_space<vmem>>, vector<2x128xf32>
      %cst_50 = arith.constant dense<0.000000e+00> : vector<2xf32>
      %68 = vector.multi_reduction <add>, %67, %cst_50 [1] : vector<2x128xf32> to vector<2xf32>
      %69 = vector.shape_cast %68 : vector<2xf32> to vector<2x1xf32>
      %70 = tpu.concatenate %63, %66, %69 in 1 : vector<2x1xf32>, vector<2x1xf32>, vector<2x1xf32> -> vector<2x3xf32>
      %c0_51 = arith.constant 0 : index
      %c0_52 = arith.constant 0 : index
      %c0_53 = arith.constant 0 : index
      %c0_54 = arith.constant 0 : index
      %71 = vector.load %arg5[%c0_51, %c0_52, %c0_53, %c0_54] : memref<1x1x2x3xf32, #tpu.memory_space<vmem>>, vector<1x1x2x3xf32>
      %72 = vector.shape_cast %71 : vector<1x1x2x3xf32> to vector<2x3xf32>
      %73 = vector.shape_cast %70 : vector<2x3xf32> to vector<1x1x2x3xf32>
      tpu.vector_store %arg5[%c0_51, %c0_52, %c0_53, %c0_54], %73 {strides = array<i32>} : memref<1x1x2x3xf32, #tpu.memory_space<vmem>>, vector<1x1x2x3xf32>,
    } else {
    }
    return
  }
  func.func @transform_0(%arg0: i32, %arg1: i32, %arg2: i32) -> (i32, i32, i32, i32) {
    %c1_i32 = arith.constant 1 : i32
    %0 = arith.muli %arg1, %c1_i32 : i32
    %1 = arith.addi %0, %arg2 : i32
    %c0_i32 = arith.constant 0 : i32
    %c0_i32_0 = arith.constant 0 : i32
    %c0_i32_1 = arith.constant 0 : i32
    return %arg0, %c0_i32, %1, %c0_i32_0 : i32, i32, i32, i32
  }
  func.func @transform_1(%arg0: i32, %arg1: i32, %arg2: i32) -> (i32, i32, i32) {
    %c1_i32 = arith.constant 1 : i32
    %0 = arith.muli %arg1, %c1_i32 : i32
    %1 = arith.addi %0, %arg2 : i32
    %c0_i32 = arith.constant 0 : i32
    %c0_i32_0 = arith.constant 0 : i32
    return %arg0, %1, %c0_i32 : i32, i32, i32
  }
  func.func @transform_2(%arg0: i32, %arg1: i32, %arg2: i32) -> (i32, i32, i32, i32) {
    %c0_i32 = arith.constant 0 : i32
    %c0_i32_0 = arith.constant 0 : i32
    %c0_i32_1 = arith.constant 0 : i32
    return %arg0, %arg1, %c0_i32, %c0_i32_0 : i32, i32, i32, i32
  }
}

</mosaic_0001>

<llo_original>
// kernel: soft_dice_loss.1
$region0: #{soft_dice_loss.1}
  #allocation0 [shape = 'u32[]', space=smem, size = 0x4, offset = 0x4, fixed_abs, tag = 'smem constant byte address 0x4 - core index']
  #allocation1 [shape = 'u32[144,128]{1,0:T(1,128)}', space=vmem, size = 0x12000, scoped, tag = 'internal scratch']
  #allocation2 [shape = 'f32[2,128]{1,0:T(2,128)}', space=vmem, size = 0x400, scoped, tag = 'scratch operand']
  #allocation3 [shape = 'f32[2,128]{1,0:T(2,128)}', space=vmem, size = 0x400, scoped, tag = 'scratch operand']
  #allocation4 [shape = 'f32[2,128]{1,0:T(2,128)}', space=vmem, size = 0x400, scoped, tag = 'scratch operand']
  %s0 = inlined_call_operand.vmem [shape: f32[2,2,8,128], index: 0, kind: input, shape index: {}]
  %s1 = inlined_call_operand.vmem [shape: s32[2,8,128], index: 1, kind: input, shape index: {}]
  %s2 = inlined_call_operand.vmem [shape: f32[2,1,2,3], index: 2, kind: output, shape index: {}]
  %s3 = sld [smem:[#allocation0]]
  $region49: #{soft_dice_loss.1} parent=0
    _
  %s5 = ssub.s32 1, %s3
  %s6 = scalar_select 0, %s5, %s3
  loop: start=0, step=1, limit=4
  $region2: #{soft_dice_loss.1} parent=0 // loop_pre_header
    _
  $region3: #{soft_dice_loss.1} parent=0 // loop_header
    %s8 = sphi 0, %s12
    %p9 = scmp.ge.s32.totalorder %s8, 4
    %s15 = sphi 0, %s34
    %s16 = sphi 0, %s30
    %s17 = sphi 0, %s26
    %s18 = sphi 0, %s15
    %s19 = sphi 0, %s16
    %s20 = sphi 0, %s17
    %s21 = sphi 0, %s18
    %s22 = sphi 0, %s19
    %s23 = sphi 0, %s20
    %s41 = sphi 0, %s43
    %s44 = sphi 0, %s41
    %s45 = sphi 0, %s44
    %s61 = sphi 0, %s45
    %s71 = sphi 0, %s73
    %s74 = sphi 0, %s71
    %s75 = sphi 0, %s74
    %s91 = sphi 0, %s75
    %s99 = sphi 0, %s101
    %s102 = sphi 0, %s99
    %s103 = sphi 0, %s102
    %s119 = sphi 0, %s103
  $region4: #{soft_dice_loss.1} parent=0 // loop_header_branch
    %11 = sbr.rel (%p9) target = $region8
  $region5: #{soft_dice_loss.1} parent=0 // loop_body
    %s13 = ssub.s32 %s8, 1
    %s14 = ssub.s32 %s8, 2
    %s24 = sadd.s32 1, %s17
    %p25 = scmp.ge.s32.totalorder %s24, 1
    %s26 = scalar_select %p25, 0, %s24
    %s27 = sadd.s32 1, %s16
    %s28 = scalar_select %p25, %s27, %s16
    %p29 = scmp.ge.s32.totalorder %s28, 1
    %s30 = scalar_select %p29, 0, %s28
    %s31 = sadd.s32 1, %s15
    %s32 = scalar_select %p29, %s31, %s15
    %p33 = scmp.ge.s32.totalorder %s32, 2
    %s34 = scalar_select %p33, 0, %s32
    %s35 = sadd.s32 %s16, %s17
    %s36 = sadd.s32 %s30, %s26
    %s37 = ssub.s32 %s15, %s34
    %s38 = ssub.s32 %s35, %s36
    %s39 = sor.u32 %s37, %s38
    %p40 = scmp.eq.s32.totalorder %s39, 0
    %s42 = sadd.s32 %s41, 1
    %s43 = scalar_select %p40, %s41, %s42
    %p46 = pneg %p40
    %p47 = scmp.eq.s32.totalorder %s8, 1
    %p48 = por %p46, %p47
    %p49 = scmp.ne.s32.totalorder %s41, %s44
    %p50 = scmp.eq.s32.totalorder %s8, 0
    %p51 = por %p49, %p50
    %p52 = scmp.ne.s32.totalorder %s41, %s44
    %p53 = scmp.eq.s32.totalorder %s13, 1
    %p54 = por %p52, %p53
    %p55 = scmp.ne.s32.totalorder %s44, %s45
    %p56 = scmp.eq.s32.totalorder %s13, 0
    %p57 = por %p55, %p56
    %p58 = scmp.ne.s32.totalorder %s44, %s45
    %p59 = scmp.eq.s32.totalorder %s14, 1
    %p60 = por %p58, %p59
    %p62 = scmp.ne.s32.totalorder %s45, %s61
    %p63 = scmp.eq.s32.totalorder %s14, 0
    %p64 = por %p62, %p63
    %s65 = sadd.s32 %s16, %s17
    %s66 = sadd.s32 %s30, %s26
    %s67 = ssub.s32 %s15, %s34
    %s68 = ssub.s32 %s65, %s66
    %s69 = sor.u32 %s67, %s68
    %p70 = scmp.eq.s32.totalorder %s69, 0
    %s72 = sadd.s32 %s71, 1
    %s73 = scalar_select %p70, %s71, %s72
    %p76 = pneg %p70
    %p77 = scmp.eq.s32.totalorder %s8, 1
    %p78 = por %p76, %p77
    %p79 = scmp.ne.s32.totalorder %s71, %s74
    %p80 = scmp.eq.s32.totalorder %s8, 0
    %p81 = por %p79, %p80
    %p82 = scmp.ne.s32.totalorder %s71, %s74
    %p83 = scmp.eq.s32.totalorder %s13, 1
    %p84 = por %p82, %p83
    %p85 = scmp.ne.s32.totalorder %s74, %s75
    %p86 = scmp.eq.s32.totalorder %s13, 0
    %p87 = por %p85, %p86
    %p88 = scmp.ne.s32.totalorder %s74, %s75
    %p89 = scmp.eq.s32.totalorder %s14, 1
    %p90 = por %p88, %p89
    %p92 = scmp.ne.s32.totalorder %s75, %s91
    %p93 = scmp.eq.s32.totalorder %s14, 0
    %p94 = por %p92, %p93
    %s95 = ssub.s32 %s15, %s34
    %s96 = ssub.s32 %s16, %s30
    %s97 = sor.u32 %s95, %s96
    %p98 = scmp.eq.s32.totalorder %s97, 0
    %s100 = sadd.s32 %s99, 1
    %s101 = scalar_select %p98, %s99, %s100
    %p104 = pneg %p98
    %p105 = scmp.eq.s32.totalorder %s8, 1
    %p106 = por %p104, %p105
    %p107 = scmp.ne.s32.totalorder %s99, %s102
    %p108 = scmp.eq.s32.totalorder %s8, 0
    %p109 = por %p107, %p108
    %p110 = scmp.ne.s32.totalorder %s99, %s102
    %p111 = scmp.eq.s32.totalorder %s13, 1
    %p112 = por %p110, %p111
    %p113 = scmp.ne.s32.totalorder %s102, %s103
    %p114 = scmp.eq.s32.totalorder %s13, 0
    %p115 = por %p113, %p114
    %p116 = scmp.ne.s32.totalorder %s102, %s103
    %p117 = scmp.eq.s32.totalorder %s14, 1
    %p118 = por %p116, %p117
    %p120 = scmp.ne.s32.totalorder %s103, %s119
    %p121 = scmp.eq.s32.totalorder %s14, 0
    %p122 = por %p120, %p121
    %p123 = scmp.le.s32.totalorder 1, %s8
    %p124 = scmp.lt.s32.totalorder %s8, 3
    %p125 = pnand %p123, %p124
    %p126 = pneg %p125
    // Predicated region
    $region9: #{soft_dice_loss.1} parent=5 // pred_check
      _
    $region10: #{soft_dice_loss.1} parent=5 // pred_check_branch
      %128 = sbr.rel (%p125) target = $region12
    $region11: #{soft_dice_loss.1} parent=5 // pred_region
      %s129 = ssub.s32 %s8, 1
    $region12: #{soft_dice_loss.1} parent=5 // pred_fallthru
      _
    %p130 = scmp.lt.s32.totalorder %s8, 2
    // Predicated region
    $region13: #{soft_dice_loss.1} parent=5 // pred_check
      %p131 = pneg %p130
    $region14: #{soft_dice_loss.1} parent=5 // pred_check_branch
      %133 = sbr.rel (%p131) target = $region16
    $region15: #{soft_dice_loss.1} parent=5 // pred_region
      // Predicated region
      $region17: #{soft_dice_loss.1} parent=15 // pred_check
        %p134 = pneg %p51
      $region18: #{soft_dice_loss.1} parent=15 // pred_check_branch
        %136 = sbr.rel (%p134) target = $region20
      $region19: #{soft_dice_loss.1} parent=15 // pred_region
        %s137 = sadd.s32 %s16, %s17
        %p138 = scmp.lt.s32.totalorder %s15, 1
        %s139 = scalar_select %p138, %s15, 1
        %p140 = scmp.lt.s32.totalorder %s137, 0
        %s141 = scalar_select %p140, %s137, 0
        %s142 = smul.addr %s139, 2
        %s143 = sadd.s32 %s141, %s142
        %s144 = smul.addr %s143, 8
        %s145 = scalar_lea.vmem %s0, %s144
        %s146 = sadd.s32 %s16, %s17
      $region20: #{soft_dice_loss.1} parent=15 // pred_fallthru
        _
      // Predicated region
      $region21: #{soft_dice_loss.1} parent=15 // pred_check
        %p147 = pneg %p81
      $region22: #{soft_dice_loss.1} parent=15 // pred_check_branch
        %149 = sbr.rel (%p147) target = $region24
      $region23: #{soft_dice_loss.1} parent=15 // pred_region
        %s150 = sadd.s32 %s16, %s17
        %p151 = scmp.lt.s32.totalorder %s15, 1
        %s152 = scalar_select %p151, %s15, 1
        %p153 = scmp.lt.s32.totalorder %s150, 0
        %s154 = scalar_select %p153, %s150, 0
        %s155 = sadd.s32 %s154, %s152
        %s156 = smul.addr %s155, 8
        %s157 = scalar_lea.vmem %s1, %s156
        %s158 = sadd.s32 %s16, %s17
      $region24: #{soft_dice_loss.1} parent=15 // pred_fallthru
        _
    $region16: #{soft_dice_loss.1} parent=5 // pred_fallthru
      _
    %p159 = scmp.le.s32.totalorder 1, %s8
    %p160 = scmp.lt.s32.totalorder %s8, 3
    %p161 = pnand %p159, %p160
    %p162 = pneg %p161
    // Predicated region
    $region25: #{soft_dice_loss.1} parent=5 // pred_check
      _
    $region26: #{soft_dice_loss.1} parent=5 // pred_check_branch
      %164 = sbr.rel (%p161) target = $region28
    $region27: #{soft_dice_loss.1} parent=5 // pred_region
      %s165 = ssub.s32 %s8, 1
      %s166 = sadd.s32 %s19, %s20
      %p167 = scmp.lt.s32.totalorder %s18, 1
      %s168 = scalar_select %p167, %s18, 1
      %p169 = scmp.lt.s32.totalorder %s166, 0
      %s170 = scalar_select %p169, %s166, 0
      %s171 = smul.addr %s168, 2
      %s172 = sadd.s32 %s170, %s171
      %s173 = smul.addr %s172, 8
      %s174 = scalar_lea.vmem %s0, %s173
      %p175 = pneg %p57
      %p176 = pneg %p54
      %s177 = sadd.s32 %s19, %s20
      %p178 = scmp.lt.s32.totalorder %s18, 1
      %s179 = scalar_select %p178, %s18, 1
      %p180 = scmp.lt.s32.totalorder %s177, 0
      %s181 = scalar_select %p180, %s177, 0
      %s182 = sadd.s32 %s181, %s179
      %s183 = smul.addr %s182, 8
      %s184 = scalar_lea.vmem %s1, %s183
      %p185 = pneg %p87
      %p186 = pneg %p84
      %p187 = pneg %p115
      %p188 = pneg %p112
      %p189 = scmp.lt.s32.totalorder %s18, 1
      %s190 = scalar_select %p189, %s18, 1
      %p191 = scmp.lt.s32.totalorder %s19, 0
      %s192 = scalar_select %p191, %s19, 0
      %s193 = sadd.s32 %s192, %s190
      %s194 = smul.addr %s193, 2
      %s195 = scalar_lea.vmem %s2, %s194
      %s196 = sadd.s32 %s19, %s20
      %p197 = scmp.lt.s32.totalorder %s18, 1
      %s198 = scalar_select %p197, %s18, 1
      %p199 = scmp.lt.s32.totalorder %s196, 0
      %s200 = scalar_select %p199, %s196, 0
      %s201 = smul.addr %s198, 2
      %s202 = sadd.s32 %s200, %s201
      %s203 = smul.addr %s202, 8
      %s204 = scalar_lea.vmem %s0, %s203
      %s205 = sadd.s32 %s19, %s20
      %s206 = sadd.s32 %s19, %s20
      %p207 = scmp.lt.s32.totalorder %s18, 1
      %s208 = scalar_select %p207, %s18, 1
      %p209 = scmp.lt.s32.totalorder %s206, 0
      %s210 = scalar_select %p209, %s206, 0
      %s211 = sadd.s32 %s210, %s208
      %s212 = smul.addr %s211, 8
      %s213 = scalar_lea.vmem %s1, %s212
      %s214 = sadd.s32 %s19, %s20
      %p215 = scmp.lt.s32.totalorder %s18, 1
      %s216 = scalar_select %p215, %s18, 1
      %p217 = scmp.lt.s32.totalorder %s19, 0
      %s218 = scalar_select %p217, %s19, 0
      %s219 = sadd.s32 %s218, %s216
      %s220 = smul.addr %s219, 2
      %s221 = scalar_lea.vmem %s2, %s220
      %p222 = scmp.eq.s32.totalorder %s20, 0
      // Predicated region
      $region29: #{soft_dice_loss.1} parent=27 // pred_check
        %p223 = pneg %p222
      $region30: #{soft_dice_loss.1} parent=27 // pred_check_branch
        %225 = sbr.rel (%p223) target = $region32
      $region31: #{soft_dice_loss.1} parent=27 // pred_region
        %226 = vst [vmem:[#allocation2] sm:$0x3] 0.0
        %227 = vst [vmem:[#allocation3] sm:$0x3] 0.0
        %228 = vst [vmem:[#allocation4] sm:$0x3] 0.0
      $region32: #{soft_dice_loss.1} parent=27 // pred_fallthru
        _
      %v229 = vld [vmem:[%s213] sm:$0xff]
      %v230 = vld [vmem:[%s204] sm:$0xff]
      %s231 = scalar_lea.vmem %s204, 8
      %v232 = vld [vmem:[%s231] sm:$0xff]
      %v233 = vmax.f32 %v230, %v232
      %v234 = vsub.f32 %v230, %v233
      %v235 = vmul.f32 %v234, 1.442695
      %v236 = vpow.pop %v235
      %v237 = vsub.f32 %v232, %v233
      %v238 = vmul.f32 %v237, 1.442695
      %v239 = vpow.pop %v238
      %v240 = vadd.f32 %v236, %v239
      %v241 = vrcp.pop %v240
      %v242 = vmul.f32 %v236, %v241
      %v243 = vmul.f32 %v239, %v241
      %vm244 = vcmp.eq.s32.totalorder %v229, 0
      %v245 = vsel %vm244, 1, 0
      %v246 = vcvt.s32.f32 %v245
      %v247 = vld [vmem:[#allocation2] sm:$0x1]
      %v248 = vmul.f32 %v242, %v246
      %v249 = vrot.slane %v248, 4
      %v250 = vadd.f32 %v248, %v249
      %v251 = vrot.slane %v250, 2
      %v252 = vadd.f32 %v250, %v251
      %v253 = vrot.slane %v252, 1
      %v254 = vadd.f32 %v252, %v253
      %v255 = vadd.f32 %v247, %v254
      %256 = vst [vmem:[#allocation2] sm:$0x1] %v255
      %v257 = vld [vmem:[#allocation3] sm:$0x1]
      %v258 = vrot.slane %v242, 4
      %v259 = vadd.f32 %v242, %v258
      %v260 = vrot.slane %v259, 2
      %v261 = vadd.f32 %v259, %v260
      %v262 = vrot.slane %v261, 1
      %v263 = vadd.f32 %v261, %v262
      %v264 = vadd.f32 %v257, %v263
      %265 = vst [vmem:[#allocation3] sm:$0x1] %v264
      %v266 = vld [vmem:[#allocation4] sm:$0x1]
      %v267 = vrot.slane %v246, 4
      %v268 = vadd.f32 %v246, %v267
      %v269 = vrot.slane %v268, 2
      %v270 = vadd.f32 %v268, %v269
      %v271 = vrot.slane %v270, 1
      %v272 = vadd.f32 %v270, %v271
      %v273 = vadd.f32 %v266, %v272
      %274 = vst [vmem:[#allocation4] sm:$0x1] %v273
      %vm275 = vcmp.eq.s32.totalorder %v229, 1
      %v276 = vsel %vm275, 1, 0
      %v277 = vcvt.s32.f32 %v276
      %v278 = vld [vmem:[#allocation2 + $0x1] sm:$0x1]
      %v279 = vmul.f32 %v243, %v277
      %v280 = vrot.slane %v279, 4
      %v281 = vadd.f32 %v279, %v280
      %v282 = vrot.slane %v281, 2
      %v283 = vadd.f32 %v281, %v282
      %v284 = vrot.slane %v283, 1
      %v285 = vadd.f32 %v283, %v284
      %v286 = vadd.f32 %v278, %v285
      %287 = vst [vmem:[#allocation2 + $0x1] sm:$0x1] %v286
      %v288 = vld [vmem:[#allocation3 + $0x1] sm:$0x1]
      %v289 = vrot.slane %v243, 4
      %v290 = vadd.f32 %v243, %v289
      %v291 = vrot.slane %v290, 2
      %v292 = vadd.f32 %v290, %v291
      %v293 = vrot.slane %v292, 1
      %v294 = vadd.f32 %v292, %v293
      %v295 = vadd.f32 %v288, %v294
      %296 = vst [vmem:[#allocation3 + $0x1] sm:$0x1] %v295
      %v297 = vld [vmem:[#allocation4 + $0x1] sm:$0x1]
      %v298 = vrot.slane %v277, 4
      %v299 = vadd.f32 %v277, %v298
      %v300 = vrot.slane %v299, 2
      %v301 = vadd.f32 %v299, %v300
      %v302 = vrot.slane %v301, 1
      %v303 = vadd.f32 %v301, %v302
      %v304 = vadd.f32 %v297, %v303
      %305 = vst [vmem:[#allocation4 + $0x1] sm:$0x1] %v304
      // Predicated region
      $region33: #{soft_dice_loss.1} parent=27 // pred_check
        %p306 = pneg %p222
      $region34: #{soft_dice_loss.1} parent=27 // pred_check_branch
        %308 = sbr.rel (%p306) target = $region36
      $region35: #{soft_dice_loss.1} parent=27 // pred_region
        %v309 = vld [vmem:[#allocation2] sm:$0x3]
        %vm310 = vcmask 1041408
        %v311 = vsel %vm310, %v309, 0.0
        %312 = vadd.xlane.f32.xlu0 %v311
        %v313 = vpop.xlane.xlu0 %312
        %v314 = vld [vmem:[#allocation3] sm:$0x3]
        %v315 = vsel %vm310, %v314, 0.0
        %316 = vadd.xlane.f32.xlu0 %v315
        %v317 = vpop.xlane.xlu0 %316
        %v318 = vld [vmem:[#allocation4] sm:$0x3]
        %v319 = vsel %vm310, %v318, 0.0
        %320 = vadd.xlane.f32.xlu0 %v319
        %v321 = vpop.xlane.xlu0 %320
        %vm322 = vcmask 7168
        %v323 = vsel %vm322, %v313, %v317
        %vm324 = vcmask 15360
        %v325 = vsel %vm324, %v323, %v321
        %vm326 = vcmask 17408
        %327 = vst.msk [vmem:[%s221] sm:$0x3] %vm326, %v325
      $region36: #{soft_dice_loss.1} parent=27 // pred_fallthru
        _
      %p328 = scmp.lt.s32.totalorder %s18, 1
      %s329 = scalar_select %p328, %s18, 1
      %p330 = scmp.lt.s32.totalorder %s19, 0
      %s331 = scalar_select %p330, %s19, 0
      %s332 = sadd.s32 %s331, %s329
      %s333 = smul.addr %s332, 2
      %s334 = scalar_lea.vmem %s2, %s333
      // Predicated region
      $region37: #{soft_dice_loss.1} parent=27 // pred_check
        %p335 = pneg %p112
      $region38: #{soft_dice_loss.1} parent=27 // pred_check_branch
        %337 = sbr.rel (%p335) target = $region40
      $region39: #{soft_dice_loss.1} parent=27 // pred_region
        _
      $region40: #{soft_dice_loss.1} parent=27 // pred_fallthru
        _
    $region28: #{soft_dice_loss.1} parent=5 // pred_fallthru
      _
    %p338 = scmp.le.s32.totalorder 2, %s8
    // Predicated region
    $region41: #{soft_dice_loss.1} parent=5 // pred_check
      %p339 = pneg %p338
    $region42: #{soft_dice_loss.1} parent=5 // pred_check_branch
      %341 = sbr.rel (%p339) target = $region44
    $region43: #{soft_dice_loss.1} parent=5 // pred_region
      %s342 = ssub.s32 %s8, 2
      // Predicated region
      $region45: #{soft_dice_loss.1} parent=43 // pred_check
        %p343 = pneg %p118
      $region46: #{soft_dice_loss.1} parent=43 // pred_check_branch
        %345 = sbr.rel (%p343) target = $region48
      $region47: #{soft_dice_loss.1} parent=43 // pred_region
        %p346 = scmp.lt.s32.totalorder %s21, 1
        %s347 = scalar_select %p346, %s21, 1
        %p348 = scmp.lt.s32.totalorder %s22, 0
        %s349 = scalar_select %p348, %s22, 0
        %s350 = sadd.s32 %s349, %s347
        %s351 = smul.addr %s350, 2
        %s352 = scalar_lea.vmem %s2, %s351
      $region48: #{soft_dice_loss.1} parent=43 // pred_fallthru
        _
    $region44: #{soft_dice_loss.1} parent=5 // pred_fallthru
      _
  $region6: #{soft_dice_loss.1} parent=0 // loop_footer
    %s12 = sadd.s32 1, %s8
  $region7: #{soft_dice_loss.1} parent=0 // loop_footer_branch
    %7 = sbr.rel target = $region3
  $region8: #{soft_dice_loss.1} parent=0 // loop_exit
    _

</llo_original>
